<compile_context>
chip_gen: v7x
topology: tpu7x:2x2x1
jax: 0.10.0
libtpu: 0.0.40
codegen_flags: <defaults>
</compile_context>

<pallas_src>
import jax
import jax.numpy as jnp
from jax.experimental import pallas as pl
from jax.experimental.pallas import tpu as pltpu


_BISECT_ITERS = 24   # resolves [0, max_lc] to f32-level resolution for the threshold
_BATCH_BLOCK = 8     # images per grid step: one image per sublane row


# ----------------------------------------------------------------------------
# Plain-JAX glue: SSD-style matching (refine_match without ARM refinement).
# ----------------------------------------------------------------------------
def _point_form(priors):
    # (cx, cy, w, h) -> (x1, y1, x2, y2)
    return jnp.concatenate(
        [priors[:, :2] - priors[:, 2:] / 2.0, priors[:, :2] + priors[:, 2:] / 2.0],
        axis=1,
    )


def _jaccard(boxes_a, boxes_b):
    # boxes in point form: (T, 4), (P, 4) -> (T, P)
    lt = jnp.maximum(boxes_a[:, None, :2], boxes_b[None, :, :2])
    rb = jnp.minimum(boxes_a[:, None, 2:], boxes_b[None, :, 2:])
    wh = jnp.clip(rb - lt, 0.0, None)
    inter = wh[..., 0] * wh[..., 1]
    area_a = ((boxes_a[:, 2] - boxes_a[:, 0]) * (boxes_a[:, 3] - boxes_a[:, 1]))[:, None]
    area_b = ((boxes_b[:, 2] - boxes_b[:, 0]) * (boxes_b[:, 3] - boxes_b[:, 1]))[None, :]
    return inter / (area_a + area_b - inter)


def _encode(matched, priors, variances):
    # matched: point form (P, 4); priors: center form (P, 4)
    g_cxcy = (matched[:, :2] + matched[:, 2:]) / 2.0 - priors[:, :2]
    g_cxcy = g_cxcy / (variances[0] * priors[:, 2:])
    g_wh = (matched[:, 2:] - matched[:, :2]) / priors[:, 2:]
    g_wh = jnp.log(g_wh) / variances[1]
    return jnp.concatenate([g_cxcy, g_wh], axis=1)


def _refine_match(threshold, truths, priors, variances, labels):
    """Standard SSD / RefineDet matching (no ARM-refined anchors)."""
    overlaps = _jaccard(truths, _point_form(priors))           # (T, P)
    best_prior_idx = jnp.argmax(overlaps, axis=1)               # (T,)
    best_truth_overlap = jnp.max(overlaps, axis=0)              # (P,)
    best_truth_idx = jnp.argmax(overlaps, axis=0)                # (P,)
    best_truth_overlap = best_truth_overlap.at[best_prior_idx].set(2.0)
    best_truth_idx = best_truth_idx.at[best_prior_idx].set(
        jnp.arange(truths.shape[0], dtype=best_truth_idx.dtype)
    )
    matches = truths[best_truth_idx]                             # (P, 4)
    conf = labels[best_truth_idx].astype(jnp.int32)              # (P,)
    conf = jnp.where(best_truth_overlap < threshold, 0, conf)
    loc = _encode(matches, priors, variances)                    # (P, 4)
    return loc, conf


# ----------------------------------------------------------------------------
# Pallas kernel: per-image loss partial sums, 8 images per grid step.
# ----------------------------------------------------------------------------
def _make_multibox_kernel(p_real, num_classes):
    C = num_classes

    def _softplus_neg_abs(x):
        # log(1 + exp(-|x|)); exp underflows cleanly for large |x|.
        return jnp.log(1.0 + jnp.exp(-jnp.abs(x)))

    def kernel(loc_p_ref, loc_t_ref, conf_ref, conf_t_ref, out_ref):
        BB, P = conf_t_ref.shape                                  # (8, P_pad)
        conf_t = conf_t_ref[...]                                  # (BB, P) i32
        posf = (conf_t > 0).astype(jnp.float32)                   # (BB, P)
        prior_id = jax.lax.broadcasted_iota(jnp.int32, (BB, P), 1)
        valid = prior_id < p_real                                  # mask lane padding

        # ---- localization: smooth-L1 summed over 4 coords, positives only -----
        sl1 = jnp.zeros((BB, P), jnp.float32)
        for c in range(4):                                        # static 4-iter loop
            d = loc_p_ref[c].astype(jnp.float32) - loc_t_ref[c].astype(jnp.float32)
            ad = jnp.abs(d)
            sl1 = sl1 + jnp.where(ad < 1.0, 0.5 * d * d, ad - 0.5)
        sl1_row = jnp.sum(sl1 * posf, axis=1, keepdims=True)      # (BB, 1)
        npos_row = jnp.sum(posf, axis=1, keepdims=True)           # (BB, 1)

        # ---- per-prior conf loss: log_sum_exp(conf) - conf[gt class] ----------
        confs = [conf_ref[c].astype(jnp.float32) for c in range(C)]   # C x (BB, P)
        conf_gt = confs[0]
        for c in range(1, C):
            conf_gt = jnp.where(conf_t == c, confs[c], conf_gt)

        if C == 2:
            # ARM binary case: lse - conf_gt == softplus(conf_other - conf_gt).
            conf_other = jnp.where(conf_t > 0, confs[0], confs[1])
            diff = conf_other - conf_gt
            lc_raw = jnp.maximum(diff, 0.0) + _softplus_neg_abs(diff)
        else:
            m = confs[0]
            for c in range(1, C):
                m = jnp.maximum(m, confs[c])
            se = jnp.zeros((BB, P), jnp.float32)
            for c in range(C):
                se = se + jnp.exp(confs[c] - m)
            lc_raw = jnp.log(se) + m - conf_gt

        lc = jnp.where(posf > 0.0, 0.0, lc_raw)                   # zero at positives
        lc = jnp.where(valid, lc, -1e30)                           # padding never selected

        # ---- hard negative mining: per-row top-num_neg threshold via bisection --
        num_neg = jnp.minimum(3.0 * npos_row, jnp.float32(p_real - 1))   # (BB, 1)
        max_lc = jnp.max(lc, axis=1, keepdims=True)                       # (BB, 1)

        def bisect_body(_, carry):
            lo, hi = carry                                         # (BB, 1) each
            mid = 0.5 * (lo + hi)
            cnt = jnp.sum((lc > mid).astype(jnp.float32), axis=1, keepdims=True)
            gt = cnt > num_neg
            return jnp.where(gt, mid, lo), jnp.where(gt, hi, mid)

        lo0 = jnp.full((BB, 1), -1.0, jnp.float32)                 # lc >= 0 on real lanes
        _, tau = jax.lax.fori_loop(0, _BISECT_ITERS, bisect_body, (lo0, max_lc))
        negf = (lc > tau).astype(jnp.float32)                      # (BB, P)
        self_sel = jnp.maximum(posf, negf)                         # pos OR hard-negative

        # ---- BCE-with-logits against one-hot(conf_t), over selected boxes ------
        bce = -conf_gt                                             # - sum_c x_c * onehot_c
        for c in range(C):
            xc = confs[c]
            bce = bce + jnp.maximum(xc, 0.0) + _softplus_neg_abs(xc)
        bce_row = jnp.sum(bce * self_sel, axis=1, keepdims=True)   # (BB, 1)
        nsel_row = jnp.sum(self_sel, axis=1, keepdims=True)        # (BB, 1)

        # ---- lane-aligned (BB, 128) partial-sum tile: lanes 0..3 per image -----
        lane = jax.lax.broadcasted_iota(jnp.int32, (BB, 128), 1)
        out_ref[...] = (jnp.where(lane == 0, sl1_row, 0.0)
                        + jnp.where(lane == 1, npos_row, 0.0)
                        + jnp.where(lane == 2, bce_row, 0.0)
                        + jnp.where(lane == 3, nsel_row, 0.0))

    return kernel


def _multibox_loss_pallas(loc_data, loc_t, conf_data, conf_t):
    B, P, C = conf_data.shape
    BB = _BATCH_BLOCK
    P_pad = -(-P // 128) * 128
    B_pad = -(-B // BB) * BB

    def pad3(x):
        return jnp.pad(x, ((0, B_pad - B), (0, P_pad - P), (0, 0)))

    # (coords/classes, batch, priors): batch fills sublanes, priors fill lanes.
    # Native dtype preserved — the kernel upcasts to f32 after load.
    loc_p_cp = jnp.transpose(pad3(loc_data), (2, 0, 1))                # (4, B_pad, P_pad)
    loc_t_cp = jnp.transpose(pad3(loc_t), (2, 0, 1))                   # (4, B_pad, P_pad)
    conf_cp = jnp.transpose(pad3(conf_data), (2, 0, 1))                # (C, B_pad, P_pad)
    conf_t_cp = jnp.pad(conf_t.astype(jnp.int32),
                        ((0, B_pad - B), (0, P_pad - P)))              # (B_pad, P_pad)

    kernel = _make_multibox_kernel(p_real=P, num_classes=C)
    partial = pl.pallas_call(
        kernel,
        out_shape=jax.ShapeDtypeStruct((B_pad, 128), jnp.float32),
        grid=(B_pad // BB,),
        in_specs=[
            pl.BlockSpec((4, BB, P_pad), lambda b: (0, b, 0)),
            pl.BlockSpec((4, BB, P_pad), lambda b: (0, b, 0)),
            pl.BlockSpec((C, BB, P_pad), lambda b: (0, b, 0)),
            pl.BlockSpec((BB, P_pad), lambda b: (b, 0)),
        ],
        out_specs=pl.BlockSpec((BB, 128), lambda b: (b, 0)),
        compiler_params=pltpu.CompilerParams(
            dimension_semantics=("parallel",)),
    )(loc_p_cp, loc_t_cp, conf_cp, conf_t_cp)
    # partial[i, 0:4] = [sl1_sum, num_pos, bce_sum, nsel] for image i (padded rows = 0).
    return partial


# ----------------------------------------------------------------------------
# Forward pass equivalent of RefineDetMultiBoxLoss (use_ARM=False, use_BCE=True).
# ----------------------------------------------------------------------------
def refinedet_multibox_loss(predictions, targets, num_classes, use_ARM=False):
    arm_loc, arm_conf, odm_loc, odm_conf, prior_data = predictions
    if use_ARM:
        # TODO(synk): use_ARM=True (ODM) branch — ARM-score filtering of positives and
        # ARM-refined-anchor matching — not implemented in this synthetic kernel.
        raise NotImplementedError("use_ARM=True branch not implemented")
    loc_data, conf_data = arm_loc, arm_conf

    B, P, _ = loc_data.shape
    prior_data = prior_data[:P, :]
    variances = (0.1, 0.2)
    threshold = 0.5

    # ARM branch: binary objectness labels. Batched matching via vmap when the
    # per-image target counts agree; Python loop fallback for ragged targets.
    tgt_shapes = {tuple(t.shape) for t in targets}
    if len(tgt_shapes) == 1:
        stacked = jnp.stack(list(targets), axis=0)                 # (B, T, 5)

        def match_one(t):
            boxes = t[:, :-1]
            labels = (t[:, -1] >= 0).astype(jnp.float32)
            return _refine_match(threshold, boxes, prior_data, variances, labels)

        loc_t, conf_t = jax.vmap(match_one)(stacked)               # (B,P,4), (B,P)
    else:
        lt, ct = [], []
        for idx in range(B):
            boxes = targets[idx][:, :-1]
            labels = (targets[idx][:, -1] >= 0).astype(jnp.float32)
            l, c = _refine_match(threshold, boxes, prior_data, variances, labels)
            lt.append(l)
            ct.append(c)
        loc_t = jnp.stack(lt, axis=0)
        conf_t = jnp.stack(ct, axis=0)

    partial = _multibox_loss_pallas(loc_data, loc_t, conf_data, conf_t)   # (B_pad, 128)
    sums = jnp.sum(partial[:, :4], axis=0)                          # (4,)
    sl1_sum, npos, bce_sum, nsel = sums[0], sums[1], sums[2], sums[3]

    C = conf_data.shape[-1]
    N = npos                                                        # total positives
    safe_n = jnp.maximum(N, 1.0)
    # F.smooth_l1_loss (mean over num_pos * 4 elements), then /= N as in the reference;
    # guarded to return 0 instead of NaN when no positive matches exist.
    loss_l = jnp.where(N > 0.0, (sl1_sum / (safe_n * 4.0)) / safe_n, 0.0)
    # BCE-with-logits mean over (num_selected * num_classes), then /= N;
    # loss_c = 0 when no boxes were selected (matches the PyTorch guard).
    safe_sel = jnp.maximum(nsel, 1.0)
    loss_c = jnp.where(nsel > 0.0,
                       (bce_sum / (safe_sel * jnp.float32(C))) / safe_n,
                       0.0)
    return loss_l, loss_c


# ----------------------------------------------------------------------------
# Demo
# ----------------------------------------------------------------------------
if __name__ == "__main__":
    key = jax.random.PRNGKey(0)
    B, P, NUM_CLASSES, T = 2, 256, 2, 3   # ARM loss => 2 classes (bg / object)

    k1, k2, k3, k4, k5, k6 = jax.random.split(key, 6)
    arm_loc = 0.1 * jax.random.normal(k1, (B, P, 4), dtype=jnp.float32)
    arm_conf = jax.random.normal(k2, (B, P, 2), dtype=jnp.float32)
    odm_loc = 0.1 * jax.random.normal(k3, (B, P, 4), dtype=jnp.float32)
    odm_conf = jax.random.normal(k4, (B, P, NUM_CLASSES), dtype=jnp.float32)

    # Deterministic prior boxes: 16x16 grid of centers, fixed 0.2x0.2 size (center form).
    g = (jnp.arange(16, dtype=jnp.float32) + 0.5) / 16.0
    cx, cy = jnp.meshgrid(g, g)
    priors = jnp.stack(
        [cx.ravel(), cy.ravel(),
         jnp.full((P,), 0.2, jnp.float32), jnp.full((P,), 0.2, jnp.float32)],
        axis=1,
    )

    # Ground-truth targets: per image [x1, y1, x2, y2, class_label].
    targets = []
    for b in range(B):
        kc = jax.random.fold_in(k5, b)
        kw = jax.random.fold_in(k6, b)
        c = jax.random.uniform(kc, (T, 2), minval=0.2, maxval=0.8)
        wh = jax.random.uniform(kw, (T, 2), minval=0.15, maxval=0.4)
        x1y1 = jnp.clip(c - wh / 2.0, 0.0, 1.0)
        x2y2 = jnp.clip(c + wh / 2.0, 0.0, 1.0)
        lbl = jnp.ones((T, 1), dtype=jnp.float32)
        targets.append(jnp.concatenate([x1y1, x2y2, lbl], axis=1))

    loss_l, loss_c = refinedet_multibox_loss(
        (arm_loc, arm_conf, odm_loc, odm_conf, priors),
        targets,
        num_classes=NUM_CLASSES,
        use_ARM=False,
    )
    jax.block_until_ready((loss_l, loss_c))
    print("KERNEL_OK")
</pallas_src>

<mosaic_0001>
module attributes {stable_mosaic.version = 11 : i64} {
  func.func @kernel(%arg0: i32, %arg1: memref<4x8x256xf32, #tpu.memory_space<vmem>>, %arg2: memref<4x8x256xf32, #tpu.memory_space<vmem>>, %arg3: memref<2x8x256xf32, #tpu.memory_space<vmem>>, %arg4: memref<8x256xi32, #tpu.memory_space<vmem>>, %arg5: memref<8x128xf32, #tpu.memory_space<vmem>>) attributes {dimension_semantics = [#tpu.dimension_semantics<parallel>], iteration_bounds = array<i64: 1>, scalar_prefetch = 0 : i64, scratch_operands = 0 : i64, tpu.core_type = #tpu.core_type<tc>, window_params = [{transform_indices = @transform_0, window_bounds = array<i64: 4, 8, 256>}, {transform_indices = @transform_1, window_bounds = array<i64: 4, 8, 256>}, {transform_indices = @transform_2, window_bounds = array<i64: 2, 8, 256>}, {transform_indices = @transform_3, window_bounds = array<i64: 8, 256>}, {transform_indices = @transform_4, window_bounds = array<i64: 8, 128>}]} {
    %c0 = arith.constant 0 : index
    %c0_0 = arith.constant 0 : index
    %0 = vector.load %arg4[%c0, %c0_0] : memref<8x256xi32, #tpu.memory_space<vmem>>, vector<8x256xi32>
    %c0_i32 = arith.constant 0 : i32
    %1 = vector.broadcast %c0_i32 : i32 to vector<8x256xi32>
    %2 = arith.cmpi sgt, %0, %1 : vector<8x256xi32>
    %3 = arith.extui %2 : vector<8x256xi1> to vector<8x256xi32>
    %4 = arith.sitofp %3 : vector<8x256xi32> to vector<8x256xf32>
    %5 = tpu.iota {dimensions = array<i32: 1>} : vector<8x256xi32>
    %c256_i32 = arith.constant 256 : i32
    %6 = vector.broadcast %c256_i32 : i32 to vector<8x256xi32>
    %7 = arith.cmpi slt, %5, %6 : vector<8x256xi32>
    %cst = arith.constant 0.000000e+00 : f32
    %8 = vector.broadcast %cst : f32 to vector<8x256xf32>
    %c0_1 = arith.constant 0 : index
    %c0_2 = arith.constant 0 : index
    %c0_3 = arith.constant 0 : index
    %9 = vector.load %arg1[%c0_1, %c0_2, %c0_3] : memref<4x8x256xf32, #tpu.memory_space<vmem>>, vector<1x8x256xf32>
    %10 = vector.shape_cast %9 : vector<1x8x256xf32> to vector<8x256xf32>
    %c0_4 = arith.constant 0 : index
    %c0_5 = arith.constant 0 : index
    %c0_6 = arith.constant 0 : index
    %11 = vector.load %arg2[%c0_4, %c0_5, %c0_6] : memref<4x8x256xf32, #tpu.memory_space<vmem>>, vector<1x8x256xf32>
    %12 = vector.shape_cast %11 : vector<1x8x256xf32> to vector<8x256xf32>
    %13 = arith.subf %10, %12 : vector<8x256xf32>
    %14 = math.absf %13 : vector<8x256xf32>
    %cst_7 = arith.constant 1.000000e+00 : f32
    %15 = vector.broadcast %cst_7 : f32 to vector<8x256xf32>
    %16 = arith.cmpf olt, %14, %15 : vector<8x256xf32>
    %cst_8 = arith.constant 5.000000e-01 : f32
    %17 = vector.broadcast %cst_8 : f32 to vector<8x256xf32>
    %18 = arith.mulf %17, %13 : vector<8x256xf32>
    %19 = arith.mulf %18, %13 : vector<8x256xf32>
    %cst_9 = arith.constant 5.000000e-01 : f32
    %20 = vector.broadcast %cst_9 : f32 to vector<8x256xf32>
    %21 = arith.subf %14, %20 : vector<8x256xf32>
    %22 = arith.select %16, %19, %21 : vector<8x256xi1>, vector<8x256xf32>
    %23 = arith.addf %8, %22 : vector<8x256xf32>
    %c1 = arith.constant 1 : index
    %c0_10 = arith.constant 0 : index
    %c0_11 = arith.constant 0 : index
    %24 = vector.load %arg1[%c1, %c0_10, %c0_11] : memref<4x8x256xf32, #tpu.memory_space<vmem>>, vector<1x8x256xf32>
    %25 = vector.shape_cast %24 : vector<1x8x256xf32> to vector<8x256xf32>
    %c1_12 = arith.constant 1 : index
    %c0_13 = arith.constant 0 : index
    %c0_14 = arith.constant 0 : index
    %26 = vector.load %arg2[%c1_12, %c0_13, %c0_14] : memref<4x8x256xf32, #tpu.memory_space<vmem>>, vector<1x8x256xf32>
    %27 = vector.shape_cast %26 : vector<1x8x256xf32> to vector<8x256xf32>
    %28 = arith.subf %25, %27 : vector<8x256xf32>
    %29 = math.absf %28 : vector<8x256xf32>
    %cst_15 = arith.constant 1.000000e+00 : f32
    %30 = vector.broadcast %cst_15 : f32 to vector<8x256xf32>
    %31 = arith.cmpf olt, %29, %30 : vector<8x256xf32>
    %cst_16 = arith.constant 5.000000e-01 : f32
    %32 = vector.broadcast %cst_16 : f32 to vector<8x256xf32>
    %33 = arith.mulf %32, %28 : vector<8x256xf32>
    %34 = arith.mulf %33, %28 : vector<8x256xf32>
    %cst_17 = arith.constant 5.000000e-01 : f32
    %35 = vector.broadcast %cst_17 : f32 to vector<8x256xf32>
    %36 = arith.subf %29, %35 : vector<8x256xf32>
    %37 = arith.select %31, %34, %36 : vector<8x256xi1>, vector<8x256xf32>
    %38 = arith.addf %23, %37 : vector<8x256xf32>
    %c2 = arith.constant 2 : index
    %c0_18 = arith.constant 0 : index
    %c0_19 = arith.constant 0 : index
    %39 = vector.load %arg1[%c2, %c0_18, %c0_19] : memref<4x8x256xf32, #tpu.memory_space<vmem>>, vector<1x8x256xf32>
    %40 = vector.shape_cast %39 : vector<1x8x256xf32> to vector<8x256xf32>
    %c2_20 = arith.constant 2 : index
    %c0_21 = arith.constant 0 : index
    %c0_22 = arith.constant 0 : index
    %41 = vector.load %arg2[%c2_20, %c0_21, %c0_22] : memref<4x8x256xf32, #tpu.memory_space<vmem>>, vector<1x8x256xf32>
    %42 = vector.shape_cast %41 : vector<1x8x256xf32> to vector<8x256xf32>
    %43 = arith.subf %40, %42 : vector<8x256xf32>
    %44 = math.absf %43 : vector<8x256xf32>
    %cst_23 = arith.constant 1.000000e+00 : f32
    %45 = vector.broadcast %cst_23 : f32 to vector<8x256xf32>
    %46 = arith.cmpf olt, %44, %45 : vector<8x256xf32>
    %cst_24 = arith.constant 5.000000e-01 : f32
    %47 = vector.broadcast %cst_24 : f32 to vector<8x256xf32>
    %48 = arith.mulf %47, %43 : vector<8x256xf32>
    %49 = arith.mulf %48, %43 : vector<8x256xf32>
    %cst_25 = arith.constant 5.000000e-01 : f32
    %50 = vector.broadcast %cst_25 : f32 to vector<8x256xf32>
    %51 = arith.subf %44, %50 : vector<8x256xf32>
    %52 = arith.select %46, %49, %51 : vector<8x256xi1>, vector<8x256xf32>
    %53 = arith.addf %38, %52 : vector<8x256xf32>
    %c3 = arith.constant 3 : index
    %c0_26 = arith.constant 0 : index
    %c0_27 = arith.constant 0 : index
    %54 = vector.load %arg1[%c3, %c0_26, %c0_27] : memref<4x8x256xf32, #tpu.memory_space<vmem>>, vector<1x8x256xf32>
    %55 = vector.shape_cast %54 : vector<1x8x256xf32> to vector<8x256xf32>
    %c3_28 = arith.constant 3 : index
    %c0_29 = arith.constant 0 : index
    %c0_30 = arith.constant 0 : index
    %56 = vector.load %arg2[%c3_28, %c0_29, %c0_30] : memref<4x8x256xf32, #tpu.memory_space<vmem>>, vector<1x8x256xf32>
    %57 = vector.shape_cast %56 : vector<1x8x256xf32> to vector<8x256xf32>
    %58 = arith.subf %55, %57 : vector<8x256xf32>
    %59 = math.absf %58 : vector<8x256xf32>
    %cst_31 = arith.constant 1.000000e+00 : f32
    %60 = vector.broadcast %cst_31 : f32 to vector<8x256xf32>
    %61 = arith.cmpf olt, %59, %60 : vector<8x256xf32>
    %cst_32 = arith.constant 5.000000e-01 : f32
    %62 = vector.broadcast %cst_32 : f32 to vector<8x256xf32>
    %63 = arith.mulf %62, %58 : vector<8x256xf32>
    %64 = arith.mulf %63, %58 : vector<8x256xf32>
    %cst_33 = arith.constant 5.000000e-01 : f32
    %65 = vector.broadcast %cst_33 : f32 to vector<8x256xf32>
    %66 = arith.subf %59, %65 : vector<8x256xf32>
    %67 = arith.select %61, %64, %66 : vector<8x256xi1>, vector<8x256xf32>
    %68 = arith.addf %53, %67 : vector<8x256xf32>
    %69 = arith.mulf %68, %4 : vector<8x256xf32>
    %cst_34 = arith.constant dense<0.000000e+00> : vector<8xf32>
    %70 = vector.multi_reduction <add>, %69, %cst_34 [1] : vector<8x256xf32> to vector<8xf32>
    %71 = vector.shape_cast %70 : vector<8xf32> to vector<8x1xf32>
    %cst_35 = arith.constant dense<0.000000e+00> : vector<8xf32>
    %72 = vector.multi_reduction <add>, %4, %cst_35 [1] : vector<8x256xf32> to vector<8xf32>
    %73 = vector.shape_cast %72 : vector<8xf32> to vector<8x1xf32>
    %c0_36 = arith.constant 0 : index
    %c0_37 = arith.constant 0 : index
    %c0_38 = arith.constant 0 : index
    %74 = vector.load %arg3[%c0_36, %c0_37, %c0_38] : memref<2x8x256xf32, #tpu.memory_space<vmem>>, vector<1x8x256xf32>
    %75 = vector.shape_cast %74 : vector<1x8x256xf32> to vector<8x256xf32>
    %c1_39 = arith.constant 1 : index
    %c0_40 = arith.constant 0 : index
    %c0_41 = arith.constant 0 : index
    %76 = vector.load %arg3[%c1_39, %c0_40, %c0_41] : memref<2x8x256xf32, #tpu.memory_space<vmem>>, vector<1x8x256xf32>
    %77 = vector.shape_cast %76 : vector<1x8x256xf32> to vector<8x256xf32>
    %c1_i32 = arith.constant 1 : i32
    %78 = vector.broadcast %c1_i32 : i32 to vector<8x256xi32>
    %79 = arith.cmpi eq, %0, %78 : vector<8x256xi32>
    %80 = arith.select %79, %77, %75 : vector<8x256xi1>, vector<8x256xf32>
    %c0_i32_42 = arith.constant 0 : i32
    %81 = vector.broadcast %c0_i32_42 : i32 to vector<8x256xi32>
    %82 = arith.cmpi sgt, %0, %81 : vector<8x256xi32>
    %83 = arith.select %82, %75, %77 : vector<8x256xi1>, vector<8x256xf32>
    %84 = arith.subf %83, %80 : vector<8x256xf32>
    %cst_43 = arith.constant 0.000000e+00 : f32
    %85 = vector.broadcast %cst_43 : f32 to vector<8x256xf32>
    %86 = arith.maximumf %84, %85 : vector<8x256xf32>
    %87 = math.absf %84 : vector<8x256xf32>
    %cst_44 = arith.constant 0.000000e+00 : f32
    %88 = vector.broadcast %cst_44 : f32 to vector<8x256xf32>
    %89 = arith.subf %88, %87 : vector<8x256xf32>
    %90 = math.exp %89 : vector<8x256xf32>
    %cst_45 = arith.constant 1.000000e+00 : f32
    %91 = vector.broadcast %cst_45 : f32 to vector<8x256xf32>
    %92 = arith.addf %91, %90 : vector<8x256xf32>
    %93 = math.log %92 : vector<8x256xf32>
    %94 = arith.addf %86, %93 : vector<8x256xf32>
    %cst_46 = arith.constant 0.000000e+00 : f32
    %95 = vector.broadcast %cst_46 : f32 to vector<8x256xf32>
    %96 = arith.cmpf ogt, %4, %95 : vector<8x256xf32>
    %cst_47 = arith.constant 0.000000e+00 : f32
    %97 = vector.broadcast %cst_47 : f32 to vector<8x256xf32>
    %98 = arith.select %96, %97, %94 : vector<8x256xi1>, vector<8x256xf32>
    %cst_48 = arith.constant -1.000000e+30 : f32
    %99 = vector.broadcast %cst_48 : f32 to vector<8x256xf32>
    %100 = arith.select %7, %98, %99 : vector<8x256xi1>, vector<8x256xf32>
    %cst_49 = arith.constant 3.000000e+00 : f32
    %101 = vector.broadcast %cst_49 : f32 to vector<8x1xf32>
    %102 = arith.mulf %101, %73 : vector<8x1xf32>
    %cst_50 = arith.constant 2.550000e+02 : f32
    %103 = vector.broadcast %cst_50 : f32 to vector<8x1xf32>
    %104 = arith.minimumf %102, %103 : vector<8x1xf32>
    %cst_51 = arith.constant dense<0xFF800000> : vector<8xf32>
    %105 = vector.multi_reduction <maximumf>, %100, %cst_51 [1] : vector<8x256xf32> to vector<8xf32>
    %106 = vector.shape_cast %105 : vector<8xf32> to vector<8x1xf32>
    %cst_52 = arith.constant -1.000000e+00 : f32
    %107 = vector.broadcast %cst_52 : f32 to vector<8x1xf32>
    %c0_i32_53 = arith.constant 0 : i32
    %c24_i32 = arith.constant 24 : i32
    %108 = arith.addi %c0_i32_53, %c24_i32 : i32
    %c1_i32_54 = arith.constant 1 : i32
    %109:2 = scf.for %arg6 = %c0_i32_53 to %108 step %c1_i32_54 iter_args(%arg7 = %107, %arg8 = %106) -> (vector<8x1xf32>, vector<8x1xf32>)  : i32 {
      %173 = arith.addf %arg7, %arg8 : vector<8x1xf32>
      %cst_72 = arith.constant 5.000000e-01 : f32
      %174 = vector.broadcast %cst_72 : f32 to vector<8x1xf32>
      %175 = arith.mulf %174, %173 : vector<8x1xf32>
      %176 = vector.broadcast %175 : vector<8x1xf32> to vector<8x256xf32>
      %177 = arith.cmpf ogt, %100, %176 : vector<8x256xf32>
      %178 = arith.extui %177 : vector<8x256xi1> to vector<8x256xi32>
      %179 = arith.sitofp %178 : vector<8x256xi32> to vector<8x256xf32>
      %cst_73 = arith.constant dense<0.000000e+00> : vector<8xf32>
      %180 = vector.multi_reduction <add>, %179, %cst_73 [1] : vector<8x256xf32> to vector<8xf32>
      %181 = vector.shape_cast %180 : vector<8xf32> to vector<8x1xf32>
      %182 = arith.cmpf ogt, %181, %104 : vector<8x1xf32>
      %183 = arith.select %182, %175, %arg7 : vector<8x1xi1>, vector<8x1xf32>
      %184 = arith.select %182, %arg8, %175 : vector<8x1xi1>, vector<8x1xf32>
      scf.yield %183, %184 : vector<8x1xf32>, vector<8x1xf32>
    }
    %110 = vector.broadcast %109#1 : vector<8x1xf32> to vector<8x256xf32>
    %111 = arith.cmpf ogt, %100, %110 : vector<8x256xf32>
    %112 = arith.extui %111 : vector<8x256xi1> to vector<8x256xi32>
    %113 = arith.sitofp %112 : vector<8x256xi32> to vector<8x256xf32>
    %114 = arith.maximumf %4, %113 : vector<8x256xf32>
    %cst_55 = arith.constant 0.000000e+00 : f32
    %115 = vector.broadcast %cst_55 : f32 to vector<8x256xf32>
    %116 = arith.subf %115, %80 : vector<8x256xf32>
    %cst_56 = arith.constant 0.000000e+00 : f32
    %117 = vector.broadcast %cst_56 : f32 to vector<8x256xf32>
    %118 = arith.maximumf %75, %117 : vector<8x256xf32>
    %119 = arith.addf %116, %118 : vector<8x256xf32>
    %120 = math.absf %75 : vector<8x256xf32>
    %cst_57 = arith.constant 0.000000e+00 : f32
    %121 = vector.broadcast %cst_57 : f32 to vector<8x256xf32>
    %122 = arith.subf %121, %120 : vector<8x256xf32>
    %123 = math.exp %122 : vector<8x256xf32>
    %cst_58 = arith.constant 1.000000e+00 : f32
    %124 = vector.broadcast %cst_58 : f32 to vector<8x256xf32>
    %125 = arith.addf %124, %123 : vector<8x256xf32>
    %126 = math.log %125 : vector<8x256xf32>
    %127 = arith.addf %119, %126 : vector<8x256xf32>
    %cst_59 = arith.constant 0.000000e+00 : f32
    %128 = vector.broadcast %cst_59 : f32 to vector<8x256xf32>
    %129 = arith.maximumf %77, %128 : vector<8x256xf32>
    %130 = arith.addf %127, %129 : vector<8x256xf32>
    %131 = math.absf %77 : vector<8x256xf32>
    %cst_60 = arith.constant 0.000000e+00 : f32
    %132 = vector.broadcast %cst_60 : f32 to vector<8x256xf32>
    %133 = arith.subf %132, %131 : vector<8x256xf32>
    %134 = math.exp %133 : vector<8x256xf32>
    %cst_61 = arith.constant 1.000000e+00 : f32
    %135 = vector.broadcast %cst_61 : f32 to vector<8x256xf32>
    %136 = arith.addf %135, %134 : vector<8x256xf32>
    %137 = math.log %136 : vector<8x256xf32>
    %138 = arith.addf %130, %137 : vector<8x256xf32>
    %139 = arith.mulf %138, %114 : vector<8x256xf32>
    %cst_62 = arith.constant dense<0.000000e+00> : vector<8xf32>
    %140 = vector.multi_reduction <add>, %139, %cst_62 [1] : vector<8x256xf32> to vector<8xf32>
    %141 = vector.shape_cast %140 : vector<8xf32> to vector<8x1xf32>
    %cst_63 = arith.constant dense<0.000000e+00> : vector<8xf32>
    %142 = vector.multi_reduction <add>, %114, %cst_63 [1] : vector<8x256xf32> to vector<8xf32>
    %143 = vector.shape_cast %142 : vector<8xf32> to vector<8x1xf32>
    %144 = tpu.iota {dimensions = array<i32: 1>} : vector<8x128xi32>
    %c0_i32_64 = arith.constant 0 : i32
    %145 = vector.broadcast %c0_i32_64 : i32 to vector<8x128xi32>
    %146 = arith.cmpi eq, %144, %145 : vector<8x128xi32>
    %cst_65 = arith.constant 0.000000e+00 : f32
    %147 = vector.shape_cast %71 : vector<8x1xf32> to vector<8x1xf32>
    %148 = vector.broadcast %147 : vector<8x1xf32> to vector<8x128xf32>
    %149 = vector.broadcast %cst_65 : f32 to vector<8x128xf32>
    %150 = arith.select %146, %148, %149 : vector<8x128xi1>, vector<8x128xf32>
    %c1_i32_66 = arith.constant 1 : i32
    %151 = vector.broadcast %c1_i32_66 : i32 to vector<8x128xi32>
    %152 = arith.cmpi eq, %144, %151 : vector<8x128xi32>
    %cst_67 = arith.constant 0.000000e+00 : f32
    %153 = vector.shape_cast %73 : vector<8x1xf32> to vector<8x1xf32>
    %154 = vector.broadcast %153 : vector<8x1xf32> to vector<8x128xf32>
    %155 = vector.broadcast %cst_67 : f32 to vector<8x128xf32>
    %156 = arith.select %152, %154, %155 : vector<8x128xi1>, vector<8x128xf32>
    %157 = arith.addf %150, %156 : vector<8x128xf32>
    %c2_i32 = arith.constant 2 : i32
    %158 = vector.broadcast %c2_i32 : i32 to vector<8x128xi32>
    %159 = arith.cmpi eq, %144, %158 : vector<8x128xi32>
    %cst_68 = arith.constant 0.000000e+00 : f32
    %160 = vector.shape_cast %141 : vector<8x1xf32> to vector<8x1xf32>
    %161 = vector.broadcast %160 : vector<8x1xf32> to vector<8x128xf32>
    %162 = vector.broadcast %cst_68 : f32 to vector<8x128xf32>
    %163 = arith.select %159, %161, %162 : vector<8x128xi1>, vector<8x128xf32>
    %164 = arith.addf %157, %163 : vector<8x128xf32>
    %c3_i32 = arith.constant 3 : i32
    %165 = vector.broadcast %c3_i32 : i32 to vector<8x128xi32>
    %166 = arith.cmpi eq, %144, %165 : vector<8x128xi32>
    %cst_69 = arith.constant 0.000000e+00 : f32
    %167 = vector.shape_cast %143 : vector<8x1xf32> to vector<8x1xf32>
    %168 = vector.broadcast %167 : vector<8x1xf32> to vector<8x128xf32>
    %169 = vector.broadcast %cst_69 : f32 to vector<8x128xf32>
    %170 = arith.select %166, %168, %169 : vector<8x128xi1>, vector<8x128xf32>
    %171 = arith.addf %164, %170 : vector<8x128xf32>
    %c0_70 = arith.constant 0 : index
    %c0_71 = arith.constant 0 : index
    %172 = vector.load %arg5[%c0_70, %c0_71] : memref<8x128xf32, #tpu.memory_space<vmem>>, vector<8x128xf32>
    tpu.vector_store %arg5[%c0_70, %c0_71], %171 {strides = array<i32>} : memref<8x128xf32, #tpu.memory_space<vmem>>, vector<8x128xf32>,
    return
  }
  func.func @transform_0(%arg0: i32) -> (i32, i32, i32) {
    %c0_i32 = arith.constant 0 : i32
    %c0_i32_0 = arith.constant 0 : i32
    %c0_i32_1 = arith.constant 0 : i32
    return %c0_i32, %arg0, %c0_i32_0 : i32, i32, i32
  }
  func.func @transform_1(%arg0: i32) -> (i32, i32, i32) {
    %c0_i32 = arith.constant 0 : i32
    %c0_i32_0 = arith.constant 0 : i32
    %c0_i32_1 = arith.constant 0 : i32
    return %c0_i32, %arg0, %c0_i32_0 : i32, i32, i32
  }
  func.func @transform_2(%arg0: i32) -> (i32, i32, i32) {
    %c0_i32 = arith.constant 0 : i32
    %c0_i32_0 = arith.constant 0 : i32
    %c0_i32_1 = arith.constant 0 : i32
    return %c0_i32, %arg0, %c0_i32_0 : i32, i32, i32
  }
  func.func @transform_3(%arg0: i32) -> (i32, i32) {
    %c0_i32 = arith.constant 0 : i32
    %c0_i32_0 = arith.constant 0 : i32
    return %arg0, %c0_i32 : i32, i32
  }
  func.func @transform_4(%arg0: i32) -> (i32, i32) {
    %c0_i32 = arith.constant 0 : i32
    %c0_i32_0 = arith.constant 0 : i32
    return %arg0, %c0_i32 : i32, i32
  }
}

</mosaic_0001>

<llo_original>
// kernel: tpu_custom_call.1
$region0: #{tpu_custom_call.1}
  #allocation0 [shape = 'u32[]', space=smem, size = 0x4, offset = 0x4, fixed_abs, tag = 'smem constant byte address 0x4 - core index']
  #allocation1 [shape = 'u32[144,128]{1,0:T(1,128)}', space=vmem, size = 0x12000, scoped, tag = 'internal scratch']
  %s0 = inlined_call_operand.hbm [shape: f32[4,8,256], index: 0, kind: input, shape index: {}]
  %s1 = inlined_call_operand.hbm [shape: f32[4,8,256], index: 1, kind: input, shape index: {}]
  %s2 = inlined_call_operand.hbm [shape: f32[2,8,256], index: 2, kind: input, shape index: {}]
  %s3 = inlined_call_operand.hbm [shape: s32[8,256], index: 3, kind: input, shape index: {}]
  %s4 = inlined_call_operand.hbm [shape: f32[8,128], index: 4, kind: output, shape index: {}]
  %s5 = sld [smem:[#allocation0]]
  $region49: #{tpu_custom_call.1} parent=0
    _
  %s7 = ssub.s32 1, %s5
  %s8 = scalar_select 0, %s7, %s5
  $region1: #{tpu_custom_call.1} parent=0
    #allocation2 [shape = 'u8[32768]{0}', space=vmem, size = 0x8000, scoped, tag = 'input window, operand 0, single buffered']
    #allocation3 [shape = 's32[1]{0}', space=sflag, size = 0x4, scoped, tag = 'scoped memory for tpu_custom_call.1']
    #allocation4 [shape = 's32[1]{0}', space=sflag, size = 0x4, scoped, tag = 'scoped memory for tpu_custom_call.1']
    #allocation5 [shape = 'u8[32768]{0}', space=vmem, size = 0x8000, scoped, tag = 'input window, operand 1, single buffered']
    #allocation6 [shape = 's32[1]{0}', space=sflag, size = 0x4, scoped, tag = 'scoped memory for tpu_custom_call.1']
    #allocation7 [shape = 'u8[16384]{0}', space=vmem, size = 0x4000, scoped, tag = 'input window, operand 2, single buffered']
    #allocation8 [shape = 'u8[8192]{0}', space=vmem, size = 0x2000, scoped, tag = 'input window, operand 3, single buffered']
    #allocation9 [shape = 's32[1]{0}', space=sflag, size = 0x4, scoped, tag = 'scoped memory for tpu_custom_call.1']
    #allocation10 [shape = 'u8[4096]{0}', space=vmem, size = 0x1000, scoped, tag = 'output window, operand 0, single buffered']
    %9 = vsyncpa [#allocation3], 0
    %10 = vsyncpa [#allocation6], 0
    %11 = vsyncpa [#allocation9], 0
    %12 = vsyncpa [#allocation4], 0
    // Predicated region
    $region2: #{tpu_custom_call.1} parent=1 // pred_check
      _
    $region3: #{tpu_custom_call.1} parent=1 // pred_check_branch
      %14 = sbr.rel (0) target = $region5
    $region4: #{tpu_custom_call.1} parent=1 // pred_region
      %s16 = ssub.s32 1024, 1024
      %17 = vsyncadd [#allocation3], %s16
      %s18 = sshll.u32 [#allocation2], 4
      %s19 = int_to_ptr.vmem [resolvable:$true] %s18
      %24 = dma.hbm_to_vmem [thread:$0]  %s0, 1024, %s19, [#allocation3], 256, 256, 16
    $region5: #{tpu_custom_call.1} parent=1 // pred_fallthru
      _
    // Predicated region
    $region6: #{tpu_custom_call.1} parent=1 // pred_check
      _
    $region7: #{tpu_custom_call.1} parent=1 // pred_check_branch
      %26 = sbr.rel (0) target = $region9
    $region8: #{tpu_custom_call.1} parent=1 // pred_region
      %s28 = ssub.s32 1024, 1024
      %29 = vsyncadd [#allocation6], %s28
      %s30 = sshll.u32 [#allocation5], 4
      %s31 = int_to_ptr.vmem [resolvable:$true] %s30
      %36 = dma.hbm_to_vmem [thread:$0]  %s1, 1024, %s31, [#allocation6], 256, 256, 16
    $region9: #{tpu_custom_call.1} parent=1 // pred_fallthru
      _
    // Predicated region
    $region10: #{tpu_custom_call.1} parent=1 // pred_check
      _
    $region11: #{tpu_custom_call.1} parent=1 // pred_check_branch
      %38 = sbr.rel (0) target = $region13
    $region12: #{tpu_custom_call.1} parent=1 // pred_region
      %s40 = ssub.s32 512, 512
      %41 = vsyncadd [#allocation6], %s40
      %s42 = sshll.u32 [#allocation7], 4
      %s43 = int_to_ptr.vmem [resolvable:$true] %s42
      %48 = dma.hbm_to_vmem [thread:$0]  %s2, 512, %s43, [#allocation6], 256, 256, 16
    $region13: #{tpu_custom_call.1} parent=1 // pred_fallthru
      _
    // Predicated region
    $region14: #{tpu_custom_call.1} parent=1 // pred_check
      _
    $region15: #{tpu_custom_call.1} parent=1 // pred_check_branch
      %50 = sbr.rel (0) target = $region17
    $region16: #{tpu_custom_call.1} parent=1 // pred_region
      %s52 = ssub.s32 256, 256
      %53 = vsyncadd [#allocation9], %s52
      %s55 = sshll.u32 [#allocation8], 4
      %s56 = int_to_ptr.vmem [resolvable:$true] %s55
      %58 = dma.hbm_to_vmem [thread:$0]  %s3, 256, %s56, [#allocation9]
    $region17: #{tpu_custom_call.1} parent=1 // pred_fallthru
      _
    // Predicated region
    $region18: #{tpu_custom_call.1} parent=1 // pred_check
      _
    $region19: #{tpu_custom_call.1} parent=1 // pred_check_branch
      %60 = sbr.rel (0) target = $region21
    $region20: #{tpu_custom_call.1} parent=1 // pred_region
      %61 = dma.done [#allocation3], 1024
    $region21: #{tpu_custom_call.1} parent=1 // pred_fallthru
      _
    // Predicated region
    $region22: #{tpu_custom_call.1} parent=1 // pred_check
      _
    $region23: #{tpu_custom_call.1} parent=1 // pred_check_branch
      %63 = sbr.rel (0) target = $region25
    $region24: #{tpu_custom_call.1} parent=1 // pred_region
      %64 = dma.done [#allocation6], 1024
    $region25: #{tpu_custom_call.1} parent=1 // pred_fallthru
      _
    // Predicated region
    $region26: #{tpu_custom_call.1} parent=1 // pred_check
      _
    $region27: #{tpu_custom_call.1} parent=1 // pred_check_branch
      %66 = sbr.rel (0) target = $region29
    $region28: #{tpu_custom_call.1} parent=1 // pred_region
      %67 = dma.done [#allocation6], 512
    $region29: #{tpu_custom_call.1} parent=1 // pred_fallthru
      _
    // Predicated region
    $region30: #{tpu_custom_call.1} parent=1 // pred_check
      _
    $region31: #{tpu_custom_call.1} parent=1 // pred_check_branch
      %69 = sbr.rel (0) target = $region33
    $region32: #{tpu_custom_call.1} parent=1 // pred_region
      %70 = dma.done [#allocation9], 256
    $region33: #{tpu_custom_call.1} parent=1 // pred_fallthru
      _
    %v71 = vld [vmem:[#allocation8] sm:$0xff]
    %v72 = vld [vmem:[#allocation8 + $0x8] sm:$0xff]
    %vm73 = vcmp.gt.s32.totalorder %v71, 0
    %vm74 = vcmp.gt.s32.totalorder %v72, 0
    %v75 = vsel %vm73, 1, 0
    %v76 = vsel %vm74, 1, 0
    %v77 = vcvt.s32.f32 %v75
    %v78 = vcvt.s32.f32 %v76
    %v79 = vlaneseq
    %v80 = vand.u32 %v79, 127
    %v81 = vadd.s32 %v80, 128
    %vm82 = vcmp.lt.s32.totalorder %v80, 256
    %vm83 = vcmp.lt.s32.totalorder %v81, 256
    %v84 = vld [vmem:[#allocation2] sm:$0xff]
    %v85 = vld [vmem:[#allocation2 + $0x8] sm:$0xff]
    %v86 = vld [vmem:[#allocation5] sm:$0xff]
    %v87 = vld [vmem:[#allocation5 + $0x8] sm:$0xff]
    %v88 = vsub.f32 %v84, %v86
    %v89 = vsub.f32 %v85, %v87
    %v90 = vand.u32 2147483647, %v88
    %v91 = vand.u32 2147483647, %v89
    %vm92 = vcmp.lt.f32.partialorder %v90, 1.0
    %vm93 = vcmp.lt.f32.partialorder %v91, 1.0
    %v94 = vmul.f32 %v88, 0.5
    %v95 = vmul.f32 %v89, 0.5
    %v96 = vmul.f32 %v94, %v88
    %v97 = vmul.f32 %v95, %v89
    %v98 = vsub.f32 %v90, 0.5
    %v99 = vsub.f32 %v91, 0.5
    %v100 = vsel %vm92, %v96, %v98
    %v101 = vsel %vm93, %v97, %v99
    %v102 = vadd.f32 %v100, 0.0
    %v103 = vadd.f32 %v101, 0.0
    %s104 = scalar_lea.vmem [#allocation2], 16
    %v105 = vld [vmem:[%s104] sm:$0xff]
    %v106 = vld [vmem:[%s104 + $0x8] sm:$0xff]
    %s107 = scalar_lea.vmem [#allocation5], 16
    %v108 = vld [vmem:[%s107] sm:$0xff]
    %v109 = vld [vmem:[%s107 + $0x8] sm:$0xff]
    %v110 = vsub.f32 %v105, %v108
    %v111 = vsub.f32 %v106, %v109
    %v112 = vand.u32 2147483647, %v110
    %v113 = vand.u32 2147483647, %v111
    %vm114 = vcmp.lt.f32.partialorder %v112, 1.0
    %vm115 = vcmp.lt.f32.partialorder %v113, 1.0
    %v116 = vmul.f32 %v110, 0.5
    %v117 = vmul.f32 %v111, 0.5
    %v118 = vmul.f32 %v116, %v110
    %v119 = vmul.f32 %v117, %v111
    %v120 = vsub.f32 %v112, 0.5
    %v121 = vsub.f32 %v113, 0.5
    %v122 = vsel %vm114, %v118, %v120
    %v123 = vsel %vm115, %v119, %v121
    %v124 = vadd.f32 %v102, %v122
    %v125 = vadd.f32 %v103, %v123
    %s126 = scalar_lea.vmem [#allocation2], 32
    %v127 = vld [vmem:[%s126] sm:$0xff]
    %v128 = vld [vmem:[%s126 + $0x8] sm:$0xff]
    %s129 = scalar_lea.vmem [#allocation5], 32
    %v130 = vld [vmem:[%s129] sm:$0xff]
    %v131 = vld [vmem:[%s129 + $0x8] sm:$0xff]
    %v132 = vsub.f32 %v127, %v130
    %v133 = vsub.f32 %v128, %v131
    %v134 = vand.u32 2147483647, %v132
    %v135 = vand.u32 2147483647, %v133
    %vm136 = vcmp.lt.f32.partialorder %v134, 1.0
    %vm137 = vcmp.lt.f32.partialorder %v135, 1.0
    %v138 = vmul.f32 %v132, 0.5
    %v139 = vmul.f32 %v133, 0.5
    %v140 = vmul.f32 %v138, %v132
    %v141 = vmul.f32 %v139, %v133
    %v142 = vsub.f32 %v134, 0.5
    %v143 = vsub.f32 %v135, 0.5
    %v144 = vsel %vm136, %v140, %v142
    %v145 = vsel %vm137, %v141, %v143
    %v146 = vadd.f32 %v124, %v144
    %v147 = vadd.f32 %v125, %v145
    %s148 = scalar_lea.vmem [#allocation2], 48
    %v149 = vld [vmem:[%s148] sm:$0xff]
    %v150 = vld [vmem:[%s148 + $0x8] sm:$0xff]
    %s151 = scalar_lea.vmem [#allocation5], 48
    %v152 = vld [vmem:[%s151] sm:$0xff]
    %v153 = vld [vmem:[%s151 + $0x8] sm:$0xff]
    %v154 = vsub.f32 %v149, %v152
    %v155 = vsub.f32 %v150, %v153
    %v156 = vand.u32 2147483647, %v154
    %v157 = vand.u32 2147483647, %v155
    %vm158 = vcmp.lt.f32.partialorder %v156, 1.0
    %vm159 = vcmp.lt.f32.partialorder %v157, 1.0
    %v160 = vmul.f32 %v154, 0.5
    %v161 = vmul.f32 %v155, 0.5
    %v162 = vmul.f32 %v160, %v154
    %v163 = vmul.f32 %v161, %v155
    %v164 = vsub.f32 %v156, 0.5
    %v165 = vsub.f32 %v157, 0.5
    %v166 = vsel %vm158, %v162, %v164
    %v167 = vsel %vm159, %v163, %v165
    %v168 = vadd.f32 %v146, %v166
    %v169 = vadd.f32 %v147, %v167
    %v170 = vmul.f32 %v168, %v77
    %v171 = vmul.f32 %v169, %v78
    %v172 = vadd.f32 %v170, %v171
    %173 = vadd.xlane.f32.xlu0 %v172
    %v174 = vpop.xlane.xlu0 %173
    %v175 = vadd.f32 %v77, %v78
    %176 = vadd.xlane.f32.xlu0 %v175
    %v177 = vpop.xlane.xlu0 %176
    %v178 = vld [vmem:[#allocation7] sm:$0xff]
    %v179 = vld [vmem:[#allocation7 + $0x8] sm:$0xff]
    %s180 = scalar_lea.vmem [#allocation7], 16
    %v181 = vld [vmem:[%s180] sm:$0xff]
    %v182 = vld [vmem:[%s180 + $0x8] sm:$0xff]
    %vm183 = vcmp.eq.s32.totalorder %v71, 1
    %vm184 = vcmp.eq.s32.totalorder %v72, 1
    %v185 = vsel %vm183, %v181, %v178
    %v186 = vsel %vm184, %v182, %v179
    %v187 = vsel %vm73, %v178, %v181
    %v188 = vsel %vm74, %v179, %v182
    %v189 = vsub.f32 %v187, %v185
    %v190 = vsub.f32 %v188, %v186
    %v191 = vmax.f32 %v189, 0.0
    %v192 = vmax.f32 %v190, 0.0
    %v193 = vand.u32 2147483647, %v189
    %v194 = vand.u32 2147483647, %v190
    %v195 = vsub.f32 0.0, %v193
    %v196 = vsub.f32 0.0, %v194
    %v197 = vmul.f32 %v195, 1.442695
    %v198 = vpow.pop %v197
    %v199 = vmul.f32 %v196, 1.442695
    %v200 = vpow.pop %v199
    %v201 = vadd.f32 %v198, 1.0
    %v202 = vadd.f32 %v200, 1.0
    %v203 = vlog2.pop %v201
    %v204 = vmul.f32 %v203, 0.6931472
    %v205 = vlog2.pop %v202
    %v206 = vmul.f32 %v205, 0.6931472
    %v207 = vadd.f32 %v191, %v204
    %v208 = vadd.f32 %v192, %v206
    %vm209 = vcmp.gt.f32.partialorder %v77, 0.0
    %vm210 = vcmp.gt.f32.partialorder %v78, 0.0
    %v211 = vsel %vm209, 0.0, %v207
    %v212 = vsel %vm210, 0.0, %v208
    %v213 = vsel %vm82, %v211, -1e+30
    %v214 = vsel %vm83, %v212, -1e+30
    %v215 = vmul.f32 %v177, 3.0
    %v216 = vmin.f32 %v215, 255.0
    %v217 = vmax.f32 %v213, %v214
    %218 = vmax.xlane.f32.xlu0 %v217
    %v219 = vpop.xlane.xlu0 %218
    loop: start=0, step=1, limit=24
    $region34: #{tpu_custom_call.1} parent=1 // loop_pre_header
      _
    $region35: #{tpu_custom_call.1} parent=1 // loop_header
      %s221 = sphi 0, %s225
      %p222 = scmp.ge.s32.totalorder %s221, 24
      %v226 = vphi -1.0, %v240
      %v227 = vphi %v219, %v241
    $region36: #{tpu_custom_call.1} parent=1 // loop_header_branch
      %224 = sbr.rel (%p222) target = $region40
    $region37: #{tpu_custom_call.1} parent=1 // loop_body
      %v228 = vadd.f32 %v226, %v227
      %v229 = vmul.f32 %v228, 0.5
      %vm230 = vcmp.gt.f32.partialorder %v213, %v229
      %vm231 = vcmp.gt.f32.partialorder %v214, %v229
      %v232 = vsel %vm230, 1, 0
      %v233 = vsel %vm231, 1, 0
      %v234 = vcvt.s32.f32 %v232
      %v235 = vcvt.s32.f32 %v233
      %v236 = vadd.f32 %v234, %v235
      %237 = vadd.xlane.f32.xlu0 %v236
      %v238 = vpop.xlane.xlu0 %237
      %vm239 = vcmp.gt.f32.partialorder %v238, %v216
      %v240 = vsel %vm239, %v229, %v226
      %v241 = vsel %vm239, %v227, %v229
    $region38: #{tpu_custom_call.1} parent=1 // loop_footer
      %s225 = sadd.s32 1, %s221
    $region39: #{tpu_custom_call.1} parent=1 // loop_footer_branch
      %220 = sbr.rel target = $region35
    $region40: #{tpu_custom_call.1} parent=1 // loop_exit
      _
    %vm242 = vcmp.gt.f32.partialorder %v213, %v227
    %vm243 = vcmp.gt.f32.partialorder %v214, %v227
    %v244 = vsel %vm242, 1, 0
    %v245 = vsel %vm243, 1, 0
    %v246 = vcvt.s32.f32 %v244
    %v247 = vcvt.s32.f32 %v245
    %v248 = vmax.f32 %v77, %v246
    %v249 = vmax.f32 %v78, %v247
    %v250 = vsub.f32 0.0, %v185
    %v251 = vsub.f32 0.0, %v186
    %v252 = vmax.f32 %v178, 0.0
    %v253 = vmax.f32 %v179, 0.0
    %v254 = vadd.f32 %v250, %v252
    %v255 = vadd.f32 %v251, %v253
    %v256 = vand.u32 2147483647, %v178
    %v257 = vand.u32 2147483647, %v179
    %v258 = vsub.f32 0.0, %v256
    %v259 = vsub.f32 0.0, %v257
    %v260 = vmul.f32 %v258, 1.442695
    %v261 = vpow.pop %v260
    %v262 = vmul.f32 %v259, 1.442695
    %v263 = vpow.pop %v262
    %v264 = vadd.f32 %v261, 1.0
    %v265 = vadd.f32 %v263, 1.0
    %v266 = vlog2.pop %v264
    %v267 = vmul.f32 %v266, 0.6931472
    %v268 = vlog2.pop %v265
    %v269 = vmul.f32 %v268, 0.6931472
    %v270 = vadd.f32 %v254, %v267
    %v271 = vadd.f32 %v255, %v269
    %v272 = vmax.f32 %v181, 0.0
    %v273 = vmax.f32 %v182, 0.0
    %v274 = vadd.f32 %v270, %v272
    %v275 = vadd.f32 %v271, %v273
    %v276 = vand.u32 2147483647, %v181
    %v277 = vand.u32 2147483647, %v182
    %v278 = vsub.f32 0.0, %v276
    %v279 = vsub.f32 0.0, %v277
    %v280 = vmul.f32 %v278, 1.442695
    %v281 = vpow.pop %v280
    %v282 = vmul.f32 %v279, 1.442695
    %v283 = vpow.pop %v282
    %v284 = vadd.f32 %v281, 1.0
    %v285 = vadd.f32 %v283, 1.0
    %v286 = vlog2.pop %v284
    %v287 = vmul.f32 %v286, 0.6931472
    %v288 = vlog2.pop %v285
    %v289 = vmul.f32 %v288, 0.6931472
    %v290 = vadd.f32 %v274, %v287
    %v291 = vadd.f32 %v275, %v289
    %v292 = vmul.f32 %v290, %v248
    %v293 = vmul.f32 %v291, %v249
    %v294 = vadd.f32 %v292, %v293
    %295 = vadd.xlane.f32.xlu0 %v294
    %v296 = vpop.xlane.xlu0 %295
    %v297 = vadd.f32 %v248, %v249
    %298 = vadd.xlane.f32.xlu0 %v297
    %v299 = vpop.xlane.xlu0 %298
    %vm300 = vcmp.eq.s32.totalorder %v80, 0
    %v301 = vsel %vm300, %v174, 0.0
    %vm302 = vcmp.eq.s32.totalorder %v80, 1
    %v303 = vsel %vm302, %v177, 0.0
    %v304 = vadd.f32 %v301, %v303
    %vm305 = vcmp.eq.s32.totalorder %v80, 2
    %v306 = vsel %vm305, %v296, 0.0
    %v307 = vadd.f32 %v304, %v306
    %vm308 = vcmp.eq.s32.totalorder %v80, 3
    %v309 = vsel %vm308, %v299, 0.0
    %v310 = vadd.f32 %v307, %v309
    %311 = vst [vmem:[#allocation10] sm:$0xff] %v310
    // Predicated region
    $region41: #{tpu_custom_call.1} parent=1 // pred_check
      _
    $region42: #{tpu_custom_call.1} parent=1 // pred_check_branch
      %313 = sbr.rel (0) target = $region44
    $region43: #{tpu_custom_call.1} parent=1 // pred_region
      %s315 = ssub.s32 128, 128
      %316 = vsyncadd [#allocation4], %s315
      %s318 = sshll.u32 [#allocation10], 4
      %s319 = int_to_ptr.vmem [resolvable:$true] %s318
      %321 = dma.vmem_to_hbm [thread:$0]  %s319, 128, %s4, [#allocation4]
    $region44: #{tpu_custom_call.1} parent=1 // pred_fallthru
      _
    // Predicated region
    $region45: #{tpu_custom_call.1} parent=1 // pred_check
      _
    $region46: #{tpu_custom_call.1} parent=1 // pred_check_branch
      %323 = sbr.rel (0) target = $region48
    $region47: #{tpu_custom_call.1} parent=1 // pred_region
      %324 = dma.done [#allocation4], 128
    $region48: #{tpu_custom_call.1} parent=1 // pred_fallthru
      _
    %325 = vsyncpa [#allocation3], 1
    %326 = vsyncpa [#allocation6], 1
    %327 = vsyncpa [#allocation9], 1
    %328 = vsyncpa [#allocation4], 1

</llo_original>
